<compile_context>
chip_gen: v7x
topology: tpu7x:2x2x1
jax: 0.10.0
libtpu: 0.0.40
codegen_flags: <defaults>
</compile_context>

<pallas_src>
import jax
import jax.numpy as jnp
from jax import lax
from jax.experimental import pallas as pl
from jax.experimental.pallas import tpu as pltpu


_TABLE_VMEM_BUDGET_BYTES = 6 * 1024 * 1024   # single-buffered table, v5e-safe
_ONE_HOT_BYTES_BUDGET = 4 * 1024 * 1024      # iota + one-hot temporaries / tile
_MAX_ROWS_PER_TILE = 512                     # resident-path batch tile (mult of 8)
_MAX_STREAM_ROWS_PER_STEP = 32               # concurrent row DMAs per grid step


def _round_up(x, m):
    return ((x + m - 1) // m) * m


# ----------------------------------------------------------------------------
# Streaming path: table stays in HBM, K concurrent row DMAs per grid step.
# ----------------------------------------------------------------------------
def _class_embed_stream_kernel(ids_ref, table_hbm, out_ref, row_buf, sems):
    """Gather K table rows with K concurrent HBM->VMEM row DMAs.

    ids_ref   : SMEM (B_pad,) int32      (scalar prefetch)
    table_hbm : ANY  (n_classes, D)      (stays in HBM)
    out_ref   : VMEM (K, D)
    row_buf   : VMEM (K, D) scratch      (DMA landing buffer)
    sems      : DMA semaphores, shape (K,)
    """
    j = pl.program_id(0)
    k = row_buf.shape[0]
    base = j * k

    # Issue all K row fetches back-to-back so they are in flight concurrently.
    for r in range(k):
        cid = ids_ref[base + r]
        pltpu.make_async_copy(
            table_hbm.at[pl.ds(cid, 1), :],
            row_buf.at[pl.ds(r, 1), :],
            sems.at[r],
        ).start()

    # Then wait for all of them (descriptor shapes match the started copies).
    for r in range(k):
        pltpu.make_async_copy(
            table_hbm.at[pl.ds(0, 1), :],
            row_buf.at[pl.ds(r, 1), :],
            sems.at[r],
        ).wait()

    out_ref[...] = row_buf[...]


def _gather_streaming(ids, table):
    """Per-row DMA gather: ids (B,) int32, table (N, D) -> (B, D)."""
    b = ids.shape[0]
    _, d = table.shape

    k = min(_MAX_STREAM_ROWS_PER_STEP, _round_up(b, 8))
    n_steps = (b + k - 1) // k
    b_pad = n_steps * k
    ids_p = jnp.pad(ids, (0, b_pad - b)) if b_pad != b else ids

    grid_spec = pltpu.PrefetchScalarGridSpec(
        num_scalar_prefetch=1,
        grid=(n_steps,),
        in_specs=[pl.BlockSpec(memory_space=pl.ANY)],               # table in HBM
        out_specs=pl.BlockSpec((k, d), lambda j, ids_ref: (j, 0)),
        scratch_shapes=[
            pltpu.VMEM((k, d), table.dtype),
            pltpu.SemaphoreType.DMA((k,)),
        ],
    )
    out = pl.pallas_call(
        _class_embed_stream_kernel,
        grid_spec=grid_spec,
        out_shape=jax.ShapeDtypeStruct((b_pad, d), table.dtype),
        # Each step writes a distinct output block -> safe to split the batch
        # axis across v7x's two TensorCores.
        compiler_params=pltpu.CompilerParams(
            dimension_semantics=("parallel",)),
    )(ids_p, table)
    return out[:b] if b_pad != b else out


# ----------------------------------------------------------------------------
# Resident path: table loaded once into VMEM scratch, one-hot MXU gather.
# ----------------------------------------------------------------------------
def _class_embed_resident_kernel(ids_ref, table_hbm, out_ref, table_vmem,
                                 load_sem):
    """Vectorized gather of a (bm, D) tile from a VMEM-resident table.

    ids_ref    : VMEM (bm, 1) int32
    table_hbm  : ANY  (n_classes, D)
    out_ref    : VMEM (bm, D)
    table_vmem : VMEM (n_classes, D) scratch (persists across grid steps)
    load_sem   : DMA semaphore
    """
    # Load the table exactly once (single-buffered by construction).  Because of
    # this step-0 load the grid axis must stay sequential ("arbitrary").
    @pl.when(pl.program_id(0) == 0)
    def _():
        cp = pltpu.make_async_copy(table_hbm, table_vmem, load_sem)
        cp.start()
        cp.wait()

    ids = ids_ref[...]                                    # (bm, 1) int32
    bm = ids.shape[0]
    n_classes = table_vmem.shape[0]

    # Fully vectorized gather on the MXU: one_hot (bm, n_classes) @ (n_classes, D).
    cls_iota = lax.broadcasted_iota(jnp.int32, (bm, n_classes), 1)
    one_hot = (cls_iota == ids).astype(table_vmem.dtype)
    gathered = jnp.dot(one_hot, table_vmem[...],
                       preferred_element_type=jnp.float32)
    # TODO(synk): for D < 128 this store is lane-masked; a lane-dense
    # (bm*D//128, 128) output slab would further speed up the store path.
    out_ref[...] = gathered.astype(out_ref.dtype)


def _gather_resident(ids, table):
    """Whole-table-in-VMEM gather: ids (B,) int32, table (N, D) -> (B, D)."""
    b = ids.shape[0]
    n_classes, d = table.shape

    # Batch-tile size: multiple of 8, capped so the per-tile one-hot temporaries
    # (int32 iota + one-hot in the table dtype) stay within budget.
    per_row_tmp_bytes = n_classes * (4 + jnp.dtype(table.dtype).itemsize)
    cap = max(8, (_ONE_HOT_BYTES_BUDGET // max(per_row_tmp_bytes, 1)) // 8 * 8)
    bm = min(_round_up(b, 8), min(_MAX_ROWS_PER_TILE, cap))
    n_tiles = (b + bm - 1) // bm
    b_pad = n_tiles * bm

    ids_p = jnp.pad(ids, (0, b_pad - b)) if b_pad != b else ids
    ids2d = ids_p.reshape(b_pad, 1)

    grid_spec = pltpu.PrefetchScalarGridSpec(
        num_scalar_prefetch=0,
        grid=(n_tiles,),
        in_specs=[
            pl.BlockSpec((bm, 1), lambda j: (j, 0)),    # ids tile (VMEM)
            pl.BlockSpec(memory_space=pl.ANY),          # table stays in HBM
        ],
        out_specs=pl.BlockSpec((bm, d), lambda j: (j, 0)),
        scratch_shapes=[
            pltpu.VMEM((n_classes, d), table.dtype),    # single-buffered table
            pltpu.SemaphoreType.DMA(()),
        ],
    )
    out = pl.pallas_call(
        _class_embed_resident_kernel,
        grid_spec=grid_spec,
        out_shape=jax.ShapeDtypeStruct((b_pad, d), table.dtype),
        # "arbitrary": the table is loaded at grid step 0 and must stay resident
        # for the remaining steps; sharding this axis across v7x's two
        # TensorCores would need a per-core table copy (not worth it here).
        compiler_params=pltpu.CompilerParams(
            dimension_semantics=("arbitrary",)),
    )(ids2d, table)
    return out[:b] if b_pad != b else out


# ----------------------------------------------------------------------------
# Forward (ClassEmbedder.forward equivalent)
# ----------------------------------------------------------------------------
def class_embedder_forward(batch, embedding_table, key="class"):
    """Pallas implementation of ClassEmbedder.forward.

    Args:
      batch: dict holding class ids under `key`, shape (B,), integer dtype.
      embedding_table: (n_classes, embed_dim) array (nn.Embedding.weight).
    Returns:
      (B, 1, embed_dim) array, same dtype as embedding_table.
    """
    ids = jnp.asarray(batch[key]).astype(jnp.int32).reshape(-1)        # (B,)
    n_classes, embed_dim = embedding_table.shape
    # Guard data-dependent addressing (row DMAs / one-hot) against bad ids.
    ids = jnp.clip(ids, 0, n_classes - 1)
    b = ids.shape[0]

    itemsize = jnp.dtype(embedding_table.dtype).itemsize
    # VMEM footprint of the resident table (sublane/lane padded layout).
    table_vmem_bytes = (_round_up(n_classes, 8) * _round_up(embed_dim, 128)
                        * itemsize)
    fits_vmem = table_vmem_bytes <= _TABLE_VMEM_BUDGET_BYTES
    # Traffic-based selection: one bulk table DMA only beats B individual
    # row fetches when B is comparable to n_classes (roughly B >= n_classes/8).
    traffic_ok = b >= max(1, n_classes // 8)

    if fits_vmem and traffic_ok:
        out2d = _gather_resident(ids, embedding_table)                 # (B, D)
    else:
        out2d = _gather_streaming(ids, embedding_table)                # (B, D)

    # PyTorch's `batch[key][:, None]` -> (B, 1, D): metadata-only reshape.
    return out2d[:, None, :]


if __name__ == "__main__":
    # Deterministic synthetic parameters / inputs (no checkpoint loading).
    n_classes = 1000
    embed_dim = 32
    batch_size = 2

    root = jax.random.PRNGKey(0)
    k_ids, k_w, k_ids2 = jax.random.split(root, 3)

    # nn.Embedding default init ~ N(0, 1)
    embedding_table = jax.random.normal(k_w, (n_classes, embed_dim), jnp.float32)
    class_ids = jax.random.randint(k_ids, (batch_size,), 0, n_classes, jnp.int32)
    batch = {"class": class_ids}

    # Small batch -> streaming (per-row DMA) path.
    out = class_embedder_forward(batch, embedding_table, key="class")
    out = jax.block_until_ready(out)
    ref = jnp.take(embedding_table, class_ids, axis=0)[:, None, :]
    assert out.shape == (batch_size, 1, embed_dim), out.shape
    assert jnp.allclose(out, ref), "streaming path mismatch vs reference"

    # Larger batch -> VMEM-resident one-hot MXU path (validate it too).
    big_b = 256
    big_ids = jax.random.randint(k_ids2, (big_b,), 0, n_classes, jnp.int32)
    out_big = class_embedder_forward({"class": big_ids}, embedding_table)
    out_big = jax.block_until_ready(out_big)
    ref_big = jnp.take(embedding_table, big_ids, axis=0)[:, None, :]
    assert out_big.shape == (big_b, 1, embed_dim), out_big.shape
    assert jnp.allclose(out_big, ref_big), "resident path mismatch vs reference"

    print("KERNEL_OK")
</pallas_src>

<mosaic_0001>
module attributes {stable_mosaic.version = 11 : i64} {
  func.func @_class_embed_stream_kernel(%arg0: i32, %arg1: memref<8xi32, #tpu.memory_space<smem>>, %arg2: memref<1000x32xf32, #tpu.memory_space<any>>, %arg3: memref<8x32xf32, #tpu.memory_space<vmem>>, %arg4: memref<8x32xf32, #tpu.memory_space<vmem>>, %arg5: memref<8x!tpu.dma_semaphore, #tpu.memory_space<semaphore_mem>>) attributes {dimension_semantics = [#tpu.dimension_semantics<parallel>], iteration_bounds = array<i64: 1>, scalar_prefetch = 1 : i64, scratch_operands = 2 : i64, tpu.core_type = #tpu.core_type<tc>, window_params = [{}, {transform_indices = @transform_1, window_bounds = array<i64: 8, 32>}]} {
    %c8_i32 = arith.constant 8 : i32
    %0 = arith.muli %arg0, %c8_i32 : i32
    %c0_i32 = arith.constant 0 : i32
    %1 = arith.addi %0, %c0_i32 : i32
    %2 = arith.index_cast %1 : i32 to index
    %3 = memref.load %arg1[%2] : memref<8xi32, #tpu.memory_space<smem>>
    %c0_i32_0 = arith.constant 0 : i32
    %c0_i32_1 = arith.constant 0 : i32
    %4 = tpu.memref_slice %arg2[%3, %c0_i32_1] : memref<1000x32xf32, #tpu.memory_space<any>> -> memref<1x32xf32, #tpu.memory_space<any>>
    %c0_i32_2 = arith.constant 0 : i32
    %c0_i32_3 = arith.constant 0 : i32
    %5 = tpu.memref_slice %arg4[%c0_i32_2, %c0_i32_3] : memref<8x32xf32, #tpu.memory_space<vmem>> -> memref<1x32xf32, #tpu.memory_space<vmem>>
    %6 = tpu.memref_slice %arg5[%c0_i32_0] : memref<8x!tpu.dma_semaphore, #tpu.memory_space<semaphore_mem>> -> memref<1x!tpu.dma_semaphore, #tpu.memory_space<semaphore_mem>>
    %7 = tpu.memref_squeeze %6 : memref<1x!tpu.dma_semaphore, #tpu.memory_space<semaphore_mem>> -> memref<!tpu.dma_semaphore, #tpu.memory_space<semaphore_mem>>
    tpu.enqueue_dma source(%4 : memref<1x32xf32, #tpu.memory_space<any>>) target(%5 : memref<1x32xf32, #tpu.memory_space<vmem>>) target_semaphore(%7 : memref<!tpu.dma_semaphore, #tpu.memory_space<semaphore_mem>>)
    %c1_i32 = arith.constant 1 : i32
    %8 = arith.addi %0, %c1_i32 : i32
    %9 = arith.index_cast %8 : i32 to index
    %10 = memref.load %arg1[%9] : memref<8xi32, #tpu.memory_space<smem>>
    %c1_i32_4 = arith.constant 1 : i32
    %c0_i32_5 = arith.constant 0 : i32
    %11 = tpu.memref_slice %arg2[%10, %c0_i32_5] : memref<1000x32xf32, #tpu.memory_space<any>> -> memref<1x32xf32, #tpu.memory_space<any>>
    %c1_i32_6 = arith.constant 1 : i32
    %c0_i32_7 = arith.constant 0 : i32
    %12 = tpu.memref_slice %arg4[%c1_i32_6, %c0_i32_7] : memref<8x32xf32, #tpu.memory_space<vmem>> -> memref<1x32xf32, #tpu.memory_space<vmem>>
    %13 = tpu.memref_slice %arg5[%c1_i32_4] : memref<8x!tpu.dma_semaphore, #tpu.memory_space<semaphore_mem>> -> memref<1x!tpu.dma_semaphore, #tpu.memory_space<semaphore_mem>>
    %14 = tpu.memref_squeeze %13 : memref<1x!tpu.dma_semaphore, #tpu.memory_space<semaphore_mem>> -> memref<!tpu.dma_semaphore, #tpu.memory_space<semaphore_mem>>
    tpu.enqueue_dma source(%11 : memref<1x32xf32, #tpu.memory_space<any>>) target(%12 : memref<1x32xf32, #tpu.memory_space<vmem>>) target_semaphore(%14 : memref<!tpu.dma_semaphore, #tpu.memory_space<semaphore_mem>>)
    %c2_i32 = arith.constant 2 : i32
    %15 = arith.addi %0, %c2_i32 : i32
    %16 = arith.index_cast %15 : i32 to index
    %17 = memref.load %arg1[%16] : memref<8xi32, #tpu.memory_space<smem>>
    %c2_i32_8 = arith.constant 2 : i32
    %c0_i32_9 = arith.constant 0 : i32
    %18 = tpu.memref_slice %arg2[%17, %c0_i32_9] : memref<1000x32xf32, #tpu.memory_space<any>> -> memref<1x32xf32, #tpu.memory_space<any>>
    %c2_i32_10 = arith.constant 2 : i32
    %c0_i32_11 = arith.constant 0 : i32
    %19 = tpu.memref_slice %arg4[%c2_i32_10, %c0_i32_11] : memref<8x32xf32, #tpu.memory_space<vmem>> -> memref<1x32xf32, #tpu.memory_space<vmem>>
    %20 = tpu.memref_slice %arg5[%c2_i32_8] : memref<8x!tpu.dma_semaphore, #tpu.memory_space<semaphore_mem>> -> memref<1x!tpu.dma_semaphore, #tpu.memory_space<semaphore_mem>>
    %21 = tpu.memref_squeeze %20 : memref<1x!tpu.dma_semaphore, #tpu.memory_space<semaphore_mem>> -> memref<!tpu.dma_semaphore, #tpu.memory_space<semaphore_mem>>
    tpu.enqueue_dma source(%18 : memref<1x32xf32, #tpu.memory_space<any>>) target(%19 : memref<1x32xf32, #tpu.memory_space<vmem>>) target_semaphore(%21 : memref<!tpu.dma_semaphore, #tpu.memory_space<semaphore_mem>>)
    %c3_i32 = arith.constant 3 : i32
    %22 = arith.addi %0, %c3_i32 : i32
    %23 = arith.index_cast %22 : i32 to index
    %24 = memref.load %arg1[%23] : memref<8xi32, #tpu.memory_space<smem>>
    %c3_i32_12 = arith.constant 3 : i32
    %c0_i32_13 = arith.constant 0 : i32
    %25 = tpu.memref_slice %arg2[%24, %c0_i32_13] : memref<1000x32xf32, #tpu.memory_space<any>> -> memref<1x32xf32, #tpu.memory_space<any>>
    %c3_i32_14 = arith.constant 3 : i32
    %c0_i32_15 = arith.constant 0 : i32
    %26 = tpu.memref_slice %arg4[%c3_i32_14, %c0_i32_15] : memref<8x32xf32, #tpu.memory_space<vmem>> -> memref<1x32xf32, #tpu.memory_space<vmem>>
    %27 = tpu.memref_slice %arg5[%c3_i32_12] : memref<8x!tpu.dma_semaphore, #tpu.memory_space<semaphore_mem>> -> memref<1x!tpu.dma_semaphore, #tpu.memory_space<semaphore_mem>>
    %28 = tpu.memref_squeeze %27 : memref<1x!tpu.dma_semaphore, #tpu.memory_space<semaphore_mem>> -> memref<!tpu.dma_semaphore, #tpu.memory_space<semaphore_mem>>
    tpu.enqueue_dma source(%25 : memref<1x32xf32, #tpu.memory_space<any>>) target(%26 : memref<1x32xf32, #tpu.memory_space<vmem>>) target_semaphore(%28 : memref<!tpu.dma_semaphore, #tpu.memory_space<semaphore_mem>>)
    %c4_i32 = arith.constant 4 : i32
    %29 = arith.addi %0, %c4_i32 : i32
    %30 = arith.index_cast %29 : i32 to index
    %31 = memref.load %arg1[%30] : memref<8xi32, #tpu.memory_space<smem>>
    %c4_i32_16 = arith.constant 4 : i32
    %c0_i32_17 = arith.constant 0 : i32
    %32 = tpu.memref_slice %arg2[%31, %c0_i32_17] : memref<1000x32xf32, #tpu.memory_space<any>> -> memref<1x32xf32, #tpu.memory_space<any>>
    %c4_i32_18 = arith.constant 4 : i32
    %c0_i32_19 = arith.constant 0 : i32
    %33 = tpu.memref_slice %arg4[%c4_i32_18, %c0_i32_19] : memref<8x32xf32, #tpu.memory_space<vmem>> -> memref<1x32xf32, #tpu.memory_space<vmem>>
    %34 = tpu.memref_slice %arg5[%c4_i32_16] : memref<8x!tpu.dma_semaphore, #tpu.memory_space<semaphore_mem>> -> memref<1x!tpu.dma_semaphore, #tpu.memory_space<semaphore_mem>>
    %35 = tpu.memref_squeeze %34 : memref<1x!tpu.dma_semaphore, #tpu.memory_space<semaphore_mem>> -> memref<!tpu.dma_semaphore, #tpu.memory_space<semaphore_mem>>
    tpu.enqueue_dma source(%32 : memref<1x32xf32, #tpu.memory_space<any>>) target(%33 : memref<1x32xf32, #tpu.memory_space<vmem>>) target_semaphore(%35 : memref<!tpu.dma_semaphore, #tpu.memory_space<semaphore_mem>>)
    %c5_i32 = arith.constant 5 : i32
    %36 = arith.addi %0, %c5_i32 : i32
    %37 = arith.index_cast %36 : i32 to index
    %38 = memref.load %arg1[%37] : memref<8xi32, #tpu.memory_space<smem>>
    %c5_i32_20 = arith.constant 5 : i32
    %c0_i32_21 = arith.constant 0 : i32
    %39 = tpu.memref_slice %arg2[%38, %c0_i32_21] : memref<1000x32xf32, #tpu.memory_space<any>> -> memref<1x32xf32, #tpu.memory_space<any>>
    %c5_i32_22 = arith.constant 5 : i32
    %c0_i32_23 = arith.constant 0 : i32
    %40 = tpu.memref_slice %arg4[%c5_i32_22, %c0_i32_23] : memref<8x32xf32, #tpu.memory_space<vmem>> -> memref<1x32xf32, #tpu.memory_space<vmem>>
    %41 = tpu.memref_slice %arg5[%c5_i32_20] : memref<8x!tpu.dma_semaphore, #tpu.memory_space<semaphore_mem>> -> memref<1x!tpu.dma_semaphore, #tpu.memory_space<semaphore_mem>>
    %42 = tpu.memref_squeeze %41 : memref<1x!tpu.dma_semaphore, #tpu.memory_space<semaphore_mem>> -> memref<!tpu.dma_semaphore, #tpu.memory_space<semaphore_mem>>
    tpu.enqueue_dma source(%39 : memref<1x32xf32, #tpu.memory_space<any>>) target(%40 : memref<1x32xf32, #tpu.memory_space<vmem>>) target_semaphore(%42 : memref<!tpu.dma_semaphore, #tpu.memory_space<semaphore_mem>>)
    %c6_i32 = arith.constant 6 : i32
    %43 = arith.addi %0, %c6_i32 : i32
    %44 = arith.index_cast %43 : i32 to index
    %45 = memref.load %arg1[%44] : memref<8xi32, #tpu.memory_space<smem>>
    %c6_i32_24 = arith.constant 6 : i32
    %c0_i32_25 = arith.constant 0 : i32
    %46 = tpu.memref_slice %arg2[%45, %c0_i32_25] : memref<1000x32xf32, #tpu.memory_space<any>> -> memref<1x32xf32, #tpu.memory_space<any>>
    %c6_i32_26 = arith.constant 6 : i32
    %c0_i32_27 = arith.constant 0 : i32
    %47 = tpu.memref_slice %arg4[%c6_i32_26, %c0_i32_27] : memref<8x32xf32, #tpu.memory_space<vmem>> -> memref<1x32xf32, #tpu.memory_space<vmem>>
    %48 = tpu.memref_slice %arg5[%c6_i32_24] : memref<8x!tpu.dma_semaphore, #tpu.memory_space<semaphore_mem>> -> memref<1x!tpu.dma_semaphore, #tpu.memory_space<semaphore_mem>>
    %49 = tpu.memref_squeeze %48 : memref<1x!tpu.dma_semaphore, #tpu.memory_space<semaphore_mem>> -> memref<!tpu.dma_semaphore, #tpu.memory_space<semaphore_mem>>
    tpu.enqueue_dma source(%46 : memref<1x32xf32, #tpu.memory_space<any>>) target(%47 : memref<1x32xf32, #tpu.memory_space<vmem>>) target_semaphore(%49 : memref<!tpu.dma_semaphore, #tpu.memory_space<semaphore_mem>>)
    %c7_i32 = arith.constant 7 : i32
    %50 = arith.addi %0, %c7_i32 : i32
    %51 = arith.index_cast %50 : i32 to index
    %52 = memref.load %arg1[%51] : memref<8xi32, #tpu.memory_space<smem>>
    %c7_i32_28 = arith.constant 7 : i32
    %c0_i32_29 = arith.constant 0 : i32
    %53 = tpu.memref_slice %arg2[%52, %c0_i32_29] : memref<1000x32xf32, #tpu.memory_space<any>> -> memref<1x32xf32, #tpu.memory_space<any>>
    %c7_i32_30 = arith.constant 7 : i32
    %c0_i32_31 = arith.constant 0 : i32
    %54 = tpu.memref_slice %arg4[%c7_i32_30, %c0_i32_31] : memref<8x32xf32, #tpu.memory_space<vmem>> -> memref<1x32xf32, #tpu.memory_space<vmem>>
    %55 = tpu.memref_slice %arg5[%c7_i32_28] : memref<8x!tpu.dma_semaphore, #tpu.memory_space<semaphore_mem>> -> memref<1x!tpu.dma_semaphore, #tpu.memory_space<semaphore_mem>>
    %56 = tpu.memref_squeeze %55 : memref<1x!tpu.dma_semaphore, #tpu.memory_space<semaphore_mem>> -> memref<!tpu.dma_semaphore, #tpu.memory_space<semaphore_mem>>
    tpu.enqueue_dma source(%53 : memref<1x32xf32, #tpu.memory_space<any>>) target(%54 : memref<1x32xf32, #tpu.memory_space<vmem>>) target_semaphore(%56 : memref<!tpu.dma_semaphore, #tpu.memory_space<semaphore_mem>>)
    %c0_i32_32 = arith.constant 0 : i32
    %c0_i32_33 = arith.constant 0 : i32
    %c0_i32_34 = arith.constant 0 : i32
    %57 = tpu.memref_slice %arg2[%c0_i32_33, %c0_i32_34] : memref<1000x32xf32, #tpu.memory_space<any>> -> memref<1x32xf32, #tpu.memory_space<any>>
    %c0_i32_35 = arith.constant 0 : i32
    %c0_i32_36 = arith.constant 0 : i32
    %58 = tpu.memref_slice %arg4[%c0_i32_35, %c0_i32_36] : memref<8x32xf32, #tpu.memory_space<vmem>> -> memref<1x32xf32, #tpu.memory_space<vmem>>
    %59 = tpu.memref_slice %arg5[%c0_i32_32] : memref<8x!tpu.dma_semaphore, #tpu.memory_space<semaphore_mem>> -> memref<1x!tpu.dma_semaphore, #tpu.memory_space<semaphore_mem>>
    %60 = tpu.memref_squeeze %59 : memref<1x!tpu.dma_semaphore, #tpu.memory_space<semaphore_mem>> -> memref<!tpu.dma_semaphore, #tpu.memory_space<semaphore_mem>>
    tpu.wait_dma2 semaphore(%60 : memref<!tpu.dma_semaphore, #tpu.memory_space<semaphore_mem>>) src(%57 : memref<1x32xf32, #tpu.memory_space<any>>) dst(%58 : memref<1x32xf32, #tpu.memory_space<vmem>>)
    %c1_i32_37 = arith.constant 1 : i32
    %c0_i32_38 = arith.constant 0 : i32
    %c0_i32_39 = arith.constant 0 : i32
    %61 = tpu.memref_slice %arg2[%c0_i32_38, %c0_i32_39] : memref<1000x32xf32, #tpu.memory_space<any>> -> memref<1x32xf32, #tpu.memory_space<any>>
    %c1_i32_40 = arith.constant 1 : i32
    %c0_i32_41 = arith.constant 0 : i32
    %62 = tpu.memref_slice %arg4[%c1_i32_40, %c0_i32_41] : memref<8x32xf32, #tpu.memory_space<vmem>> -> memref<1x32xf32, #tpu.memory_space<vmem>>
    %63 = tpu.memref_slice %arg5[%c1_i32_37] : memref<8x!tpu.dma_semaphore, #tpu.memory_space<semaphore_mem>> -> memref<1x!tpu.dma_semaphore, #tpu.memory_space<semaphore_mem>>
    %64 = tpu.memref_squeeze %63 : memref<1x!tpu.dma_semaphore, #tpu.memory_space<semaphore_mem>> -> memref<!tpu.dma_semaphore, #tpu.memory_space<semaphore_mem>>
    tpu.wait_dma2 semaphore(%64 : memref<!tpu.dma_semaphore, #tpu.memory_space<semaphore_mem>>) src(%61 : memref<1x32xf32, #tpu.memory_space<any>>) dst(%62 : memref<1x32xf32, #tpu.memory_space<vmem>>)
    %c2_i32_42 = arith.constant 2 : i32
    %c0_i32_43 = arith.constant 0 : i32
    %c0_i32_44 = arith.constant 0 : i32
    %65 = tpu.memref_slice %arg2[%c0_i32_43, %c0_i32_44] : memref<1000x32xf32, #tpu.memory_space<any>> -> memref<1x32xf32, #tpu.memory_space<any>>
    %c2_i32_45 = arith.constant 2 : i32
    %c0_i32_46 = arith.constant 0 : i32
    %66 = tpu.memref_slice %arg4[%c2_i32_45, %c0_i32_46] : memref<8x32xf32, #tpu.memory_space<vmem>> -> memref<1x32xf32, #tpu.memory_space<vmem>>
    %67 = tpu.memref_slice %arg5[%c2_i32_42] : memref<8x!tpu.dma_semaphore, #tpu.memory_space<semaphore_mem>> -> memref<1x!tpu.dma_semaphore, #tpu.memory_space<semaphore_mem>>
    %68 = tpu.memref_squeeze %67 : memref<1x!tpu.dma_semaphore, #tpu.memory_space<semaphore_mem>> -> memref<!tpu.dma_semaphore, #tpu.memory_space<semaphore_mem>>
    tpu.wait_dma2 semaphore(%68 : memref<!tpu.dma_semaphore, #tpu.memory_space<semaphore_mem>>) src(%65 : memref<1x32xf32, #tpu.memory_space<any>>) dst(%66 : memref<1x32xf32, #tpu.memory_space<vmem>>)
    %c3_i32_47 = arith.constant 3 : i32
    %c0_i32_48 = arith.constant 0 : i32
    %c0_i32_49 = arith.constant 0 : i32
    %69 = tpu.memref_slice %arg2[%c0_i32_48, %c0_i32_49] : memref<1000x32xf32, #tpu.memory_space<any>> -> memref<1x32xf32, #tpu.memory_space<any>>
    %c3_i32_50 = arith.constant 3 : i32
    %c0_i32_51 = arith.constant 0 : i32
    %70 = tpu.memref_slice %arg4[%c3_i32_50, %c0_i32_51] : memref<8x32xf32, #tpu.memory_space<vmem>> -> memref<1x32xf32, #tpu.memory_space<vmem>>
    %71 = tpu.memref_slice %arg5[%c3_i32_47] : memref<8x!tpu.dma_semaphore, #tpu.memory_space<semaphore_mem>> -> memref<1x!tpu.dma_semaphore, #tpu.memory_space<semaphore_mem>>
    %72 = tpu.memref_squeeze %71 : memref<1x!tpu.dma_semaphore, #tpu.memory_space<semaphore_mem>> -> memref<!tpu.dma_semaphore, #tpu.memory_space<semaphore_mem>>
    tpu.wait_dma2 semaphore(%72 : memref<!tpu.dma_semaphore, #tpu.memory_space<semaphore_mem>>) src(%69 : memref<1x32xf32, #tpu.memory_space<any>>) dst(%70 : memref<1x32xf32, #tpu.memory_space<vmem>>)
    %c4_i32_52 = arith.constant 4 : i32
    %c0_i32_53 = arith.constant 0 : i32
    %c0_i32_54 = arith.constant 0 : i32
    %73 = tpu.memref_slice %arg2[%c0_i32_53, %c0_i32_54] : memref<1000x32xf32, #tpu.memory_space<any>> -> memref<1x32xf32, #tpu.memory_space<any>>
    %c4_i32_55 = arith.constant 4 : i32
    %c0_i32_56 = arith.constant 0 : i32
    %74 = tpu.memref_slice %arg4[%c4_i32_55, %c0_i32_56] : memref<8x32xf32, #tpu.memory_space<vmem>> -> memref<1x32xf32, #tpu.memory_space<vmem>>
    %75 = tpu.memref_slice %arg5[%c4_i32_52] : memref<8x!tpu.dma_semaphore, #tpu.memory_space<semaphore_mem>> -> memref<1x!tpu.dma_semaphore, #tpu.memory_space<semaphore_mem>>
    %76 = tpu.memref_squeeze %75 : memref<1x!tpu.dma_semaphore, #tpu.memory_space<semaphore_mem>> -> memref<!tpu.dma_semaphore, #tpu.memory_space<semaphore_mem>>
    tpu.wait_dma2 semaphore(%76 : memref<!tpu.dma_semaphore, #tpu.memory_space<semaphore_mem>>) src(%73 : memref<1x32xf32, #tpu.memory_space<any>>) dst(%74 : memref<1x32xf32, #tpu.memory_space<vmem>>)
    %c5_i32_57 = arith.constant 5 : i32
    %c0_i32_58 = arith.constant 0 : i32
    %c0_i32_59 = arith.constant 0 : i32
    %77 = tpu.memref_slice %arg2[%c0_i32_58, %c0_i32_59] : memref<1000x32xf32, #tpu.memory_space<any>> -> memref<1x32xf32, #tpu.memory_space<any>>
    %c5_i32_60 = arith.constant 5 : i32
    %c0_i32_61 = arith.constant 0 : i32
    %78 = tpu.memref_slice %arg4[%c5_i32_60, %c0_i32_61] : memref<8x32xf32, #tpu.memory_space<vmem>> -> memref<1x32xf32, #tpu.memory_space<vmem>>
    %79 = tpu.memref_slice %arg5[%c5_i32_57] : memref<8x!tpu.dma_semaphore, #tpu.memory_space<semaphore_mem>> -> memref<1x!tpu.dma_semaphore, #tpu.memory_space<semaphore_mem>>
    %80 = tpu.memref_squeeze %79 : memref<1x!tpu.dma_semaphore, #tpu.memory_space<semaphore_mem>> -> memref<!tpu.dma_semaphore, #tpu.memory_space<semaphore_mem>>
    tpu.wait_dma2 semaphore(%80 : memref<!tpu.dma_semaphore, #tpu.memory_space<semaphore_mem>>) src(%77 : memref<1x32xf32, #tpu.memory_space<any>>) dst(%78 : memref<1x32xf32, #tpu.memory_space<vmem>>)
    %c6_i32_62 = arith.constant 6 : i32
    %c0_i32_63 = arith.constant 0 : i32
    %c0_i32_64 = arith.constant 0 : i32
    %81 = tpu.memref_slice %arg2[%c0_i32_63, %c0_i32_64] : memref<1000x32xf32, #tpu.memory_space<any>> -> memref<1x32xf32, #tpu.memory_space<any>>
    %c6_i32_65 = arith.constant 6 : i32
    %c0_i32_66 = arith.constant 0 : i32
    %82 = tpu.memref_slice %arg4[%c6_i32_65, %c0_i32_66] : memref<8x32xf32, #tpu.memory_space<vmem>> -> memref<1x32xf32, #tpu.memory_space<vmem>>
    %83 = tpu.memref_slice %arg5[%c6_i32_62] : memref<8x!tpu.dma_semaphore, #tpu.memory_space<semaphore_mem>> -> memref<1x!tpu.dma_semaphore, #tpu.memory_space<semaphore_mem>>
    %84 = tpu.memref_squeeze %83 : memref<1x!tpu.dma_semaphore, #tpu.memory_space<semaphore_mem>> -> memref<!tpu.dma_semaphore, #tpu.memory_space<semaphore_mem>>
    tpu.wait_dma2 semaphore(%84 : memref<!tpu.dma_semaphore, #tpu.memory_space<semaphore_mem>>) src(%81 : memref<1x32xf32, #tpu.memory_space<any>>) dst(%82 : memref<1x32xf32, #tpu.memory_space<vmem>>)
    %c7_i32_67 = arith.constant 7 : i32
    %c0_i32_68 = arith.constant 0 : i32
    %c0_i32_69 = arith.constant 0 : i32
    %85 = tpu.memref_slice %arg2[%c0_i32_68, %c0_i32_69] : memref<1000x32xf32, #tpu.memory_space<any>> -> memref<1x32xf32, #tpu.memory_space<any>>
    %c7_i32_70 = arith.constant 7 : i32
    %c0_i32_71 = arith.constant 0 : i32
    %86 = tpu.memref_slice %arg4[%c7_i32_70, %c0_i32_71] : memref<8x32xf32, #tpu.memory_space<vmem>> -> memref<1x32xf32, #tpu.memory_space<vmem>>
    %87 = tpu.memref_slice %arg5[%c7_i32_67] : memref<8x!tpu.dma_semaphore, #tpu.memory_space<semaphore_mem>> -> memref<1x!tpu.dma_semaphore, #tpu.memory_space<semaphore_mem>>
    %88 = tpu.memref_squeeze %87 : memref<1x!tpu.dma_semaphore, #tpu.memory_space<semaphore_mem>> -> memref<!tpu.dma_semaphore, #tpu.memory_space<semaphore_mem>>
    tpu.wait_dma2 semaphore(%88 : memref<!tpu.dma_semaphore, #tpu.memory_space<semaphore_mem>>) src(%85 : memref<1x32xf32, #tpu.memory_space<any>>) dst(%86 : memref<1x32xf32, #tpu.memory_space<vmem>>)
    %c0 = arith.constant 0 : index
    %c0_72 = arith.constant 0 : index
    %89 = vector.load %arg4[%c0, %c0_72] : memref<8x32xf32, #tpu.memory_space<vmem>>, vector<8x32xf32>
    %c0_73 = arith.constant 0 : index
    %c0_74 = arith.constant 0 : index
    %90 = vector.load %arg3[%c0_73, %c0_74] : memref<8x32xf32, #tpu.memory_space<vmem>>, vector<8x32xf32>
    tpu.vector_store %arg3[%c0_73, %c0_74], %89 {strides = array<i32>} : memref<8x32xf32, #tpu.memory_space<vmem>>, vector<8x32xf32>,
    return
  }
  func.func @transform_1(%arg0: i32, %arg1: memref<8xi32, #tpu.memory_space<smem>>) -> (i32, i32) {
    %c0_i32 = arith.constant 0 : i32
    %c0_i32_0 = arith.constant 0 : i32
    return %arg0, %c0_i32 : i32, i32
  }
}

</mosaic_0001>

<llo_original>
// kernel: tpu_custom_call.1
$region0: #{tpu_custom_call.1}
  #allocation0 [shape = 'u32[]', space=smem, size = 0x4, offset = 0x4, fixed_abs, tag = 'smem constant byte address 0x4 - core index']
  #allocation1 [shape = 'u32[144,128]{1,0:T(1,128)}', space=vmem, size = 0x12000, scoped, tag = 'internal scratch']
  #allocation2 [shape = 'f32[8,32]{1,0:T(8,128)}', space=vmem, size = 0x1000, scoped, tag = 'scratch operand']
  #allocation3 [shape = 's32[8]{0}', space=sflag, size = 0x20, scoped, tag = 'scratch operand']
  #allocation4 [shape = 's32[1]{0}', space=sflag, size = 0x4, scoped, tag = 'scoped memory for tpu_custom_call.1']
  #allocation5 [shape = 'u8[512]{0}', space=smem, size = 0x200, scoped, tag = 'prefetched SMEM operand 0']
  #allocation8 [shape = 's32[]', space=sflag, size = 0x4, offset = 0, fixed_abs, tag = 'sflag constant byte address 0x0 - dummy sync flag']
  #allocation9 [shape = 's32[]', space=sflag, size = 0x4, offset = 0, fixed_abs, tag = 'sflag constant byte address 0x0 - dummy sync flag']
  #allocation10 [shape = 's32[]', space=sflag, size = 0x4, offset = 0, fixed_abs, tag = 'sflag constant byte address 0x0 - dummy sync flag']
  #allocation11 [shape = 's32[]', space=sflag, size = 0x4, offset = 0, fixed_abs, tag = 'sflag constant byte address 0x0 - dummy sync flag']
  #allocation12 [shape = 's32[]', space=sflag, size = 0x4, offset = 0, fixed_abs, tag = 'sflag constant byte address 0x0 - dummy sync flag']
  #allocation13 [shape = 's32[]', space=sflag, size = 0x4, offset = 0, fixed_abs, tag = 'sflag constant byte address 0x0 - dummy sync flag']
  #allocation14 [shape = 's32[]', space=sflag, size = 0x4, offset = 0, fixed_abs, tag = 'sflag constant byte address 0x0 - dummy sync flag']
  #allocation15 [shape = 's32[]', space=sflag, size = 0x4, offset = 0, fixed_abs, tag = 'sflag constant byte address 0x0 - dummy sync flag']
  %s0 = inlined_call_operand.vmem [shape: s32[8], index: 0, kind: input, shape index: {}]
  %s1 = inlined_call_operand.vmem [shape: f32[1000,32], index: 1, kind: input, shape index: {}]
  %s2 = inlined_call_operand.hbm [shape: f32[8,32], index: 2, kind: output, shape index: {}]
  %s3 = sld [smem:[#allocation0]]
  $region250: #{tpu_custom_call.1} parent=0
    _
  %s5 = ssub.s32 1, %s3
  %s6 = scalar_select 0, %s5, %s3
  %s7 = sshll.u32 %s0, 4
  %s8 = int_to_ptr.vmem [resolvable:$true] %s7
  %10 = dma.vmem_to_smem %s8, 16, [#allocation5], [#allocation4]
  %11 = dma.done [#allocation4], 16
  %12 = sfence
  $region1: #{tpu_custom_call.1} parent=0
    #allocation6 [shape = 'u8[4096]{0}', space=vmem, size = 0x1000, scoped, tag = 'output window, operand 0, single buffered']
    #allocation7 [shape = 's32[1]{0}', space=sflag, size = 0x4, scoped, tag = 'scoped memory for tpu_custom_call.1']
    %13 = vsyncpa [#allocation7], 0
    %s14 = smul.u32 0, 8
    %s15 = sld [smem:[#allocation5 + %s14]]
    %s16 = scalar_lea.vmem %s1, %s15
    %p18 = scmp.lt.u32.totalorder 1, 8
    %p19 = pneg %p18
    // Predicated region
    $region2: #{tpu_custom_call.1} parent=1 // pred_check
      _
    $region3: #{tpu_custom_call.1} parent=1 // pred_check_branch
      %21 = sbr.rel (%p18) target = $region5
    $region4: #{tpu_custom_call.1} parent=1 // pred_region
      %s36 = sand.u32 1, 7
      %p37 = scmp.eq.s32.totalorder %s36, 0
      %p38 = pneg %p37
      // Predicated region
      $region17: #{tpu_custom_call.1} parent=4 // pred_check
        _
      $region18: #{tpu_custom_call.1} parent=4 // pred_check_branch
        %40 = sbr.rel (%p37) target = $region20
      $region19: #{tpu_custom_call.1} parent=4 // pred_region
        %s41 = sand.u32 1, 7
        %s42 = ssub.s32 1, %s41
        %s43 = scalar_lea.vmem %s16, %s42
        %s44 = ssub.s32 1, %s41
        %s45 = scalar_lea.vmem [#allocation2], %s44
        %s46 = sshllo.u32 0, %s41
        loop: start=0, step=1, limit=1
        $region21: #{tpu_custom_call.1} parent=19 // loop_pre_header
          _
        $region22: #{tpu_custom_call.1} parent=19 // loop_header
          %s48 = sphi 0, %s52
          %p49 = scmp.ge.s32.totalorder %s48, 1
          %s53 = sphi %s43, %s43
          %s54 = sphi %s45, %s45
        $region23: #{tpu_custom_call.1} parent=19 // loop_header_branch
          %51 = sbr.rel (%p49) target = $region27
        $region24: #{tpu_custom_call.1} parent=19 // loop_body
          %v55 = vld [vmem:[%s53] sm:%s46]
          %56 = vst [vmem:[%s54] sm:%s46] %v55
        $region25: #{tpu_custom_call.1} parent=19 // loop_footer
          %s52 = sadd.s32 1, %s48
        $region26: #{tpu_custom_call.1} parent=19 // loop_footer_branch
          %47 = sbr.rel target = $region22
        $region27: #{tpu_custom_call.1} parent=19 // loop_exit
          _
      $region20: #{tpu_custom_call.1} parent=4 // pred_fallthru
        _
    $region5: #{tpu_custom_call.1} parent=1 // pred_fallthru
      _
    // Predicated region
    $region6: #{tpu_custom_call.1} parent=1 // pred_check
      %p22 = pneg %p18
    $region7: #{tpu_custom_call.1} parent=1 // pred_check_branch
      %24 = sbr.rel (%p22) target = $region9
    $region8: #{tpu_custom_call.1} parent=1 // pred_region
      %s25 = sshllo.u32 0, 1
      loop: start=0, step=1, limit=1
      $region10: #{tpu_custom_call.1} parent=8 // loop_pre_header
        _
      $region11: #{tpu_custom_call.1} parent=8 // loop_header
        %s27 = sphi 0, %s31
        %p28 = scmp.ge.s32.totalorder %s27, 1
        %s32 = sphi %s16, %s16
        %s33 = sphi [#allocation2], [#allocation2]
      $region12: #{tpu_custom_call.1} parent=8 // loop_header_branch
        %30 = sbr.rel (%p28) target = $region16
      $region13: #{tpu_custom_call.1} parent=8 // loop_body
        %v34 = vld [vmem:[%s32] sm:%s25]
        %35 = vst [vmem:[%s33] sm:%s25] %v34
      $region14: #{tpu_custom_call.1} parent=8 // loop_footer
        %s31 = sadd.s32 1, %s27
      $region15: #{tpu_custom_call.1} parent=8 // loop_footer_branch
        %26 = sbr.rel target = $region11
      $region16: #{tpu_custom_call.1} parent=8 // loop_exit
        _
    $region9: #{tpu_custom_call.1} parent=1 // pred_fallthru
      _
    // Predicated region
    $region28: #{tpu_custom_call.1} parent=1 // pred_check
      _
    $region29: #{tpu_custom_call.1} parent=1 // pred_check_branch
      %59 = sbr.rel (0) target = $region31
    $region30: #{tpu_custom_call.1} parent=1 // pred_region
      %60 = vsyncadd [#allocation3], 16
    $region31: #{tpu_custom_call.1} parent=1 // pred_fallthru
      _
    %s61 = sadd.s32 %s14, 1
    %s62 = sld [smem:[#allocation5 + %s61]]
    %s63 = scalar_lea.vmem %s1, %s62
    %s64 = scalar_lea.vmem [#allocation2], 1
    %s65 = scalar_lea.sflag [#allocation3], 1
    %p67 = scmp.lt.u32.totalorder 1, 8
    %p68 = pneg %p67
    // Predicated region
    $region32: #{tpu_custom_call.1} parent=1 // pred_check
      _
    $region33: #{tpu_custom_call.1} parent=1 // pred_check_branch
      %70 = sbr.rel (%p67) target = $region35
    $region34: #{tpu_custom_call.1} parent=1 // pred_region
      %s85 = sand.u32 1, 7
      %p86 = scmp.eq.s32.totalorder %s85, 0
      %p87 = pneg %p86
      // Predicated region
      $region47: #{tpu_custom_call.1} parent=34 // pred_check
        _
      $region48: #{tpu_custom_call.1} parent=34 // pred_check_branch
        %89 = sbr.rel (%p86) target = $region50
      $region49: #{tpu_custom_call.1} parent=34 // pred_region
        %s90 = sand.u32 1, 7
        %s91 = ssub.s32 1, %s90
        %s92 = scalar_lea.vmem %s63, %s91
        %s93 = ssub.s32 1, %s90
        %s94 = scalar_lea.vmem %s64, %s93 [#allocation2]
        %s95 = sshllo.u32 0, %s90
        loop: start=0, step=1, limit=1
        $region51: #{tpu_custom_call.1} parent=49 // loop_pre_header
          _
        $region52: #{tpu_custom_call.1} parent=49 // loop_header
          %s97 = sphi 0, %s101
          %p98 = scmp.ge.s32.totalorder %s97, 1
          %s102 = sphi %s92, %s92
          %s103 = sphi %s94, %s94
        $region53: #{tpu_custom_call.1} parent=49 // loop_header_branch
          %100 = sbr.rel (%p98) target = $region57
        $region54: #{tpu_custom_call.1} parent=49 // loop_body
          %v104 = vld [vmem:[%s102] sm:%s95]
          %105 = vst [vmem:[%s103] sm:%s95] %v104
        $region55: #{tpu_custom_call.1} parent=49 // loop_footer
          %s101 = sadd.s32 1, %s97
        $region56: #{tpu_custom_call.1} parent=49 // loop_footer_branch
          %96 = sbr.rel target = $region52
        $region57: #{tpu_custom_call.1} parent=49 // loop_exit
          _
      $region50: #{tpu_custom_call.1} parent=34 // pred_fallthru
        _
    $region35: #{tpu_custom_call.1} parent=1 // pred_fallthru
      _
    // Predicated region
    $region36: #{tpu_custom_call.1} parent=1 // pred_check
      %p71 = pneg %p67
    $region37: #{tpu_custom_call.1} parent=1 // pred_check_branch
      %73 = sbr.rel (%p71) target = $region39
    $region38: #{tpu_custom_call.1} parent=1 // pred_region
      %s74 = sshllo.u32 0, 1
      loop: start=0, step=1, limit=1
      $region40: #{tpu_custom_call.1} parent=38 // loop_pre_header
        _
      $region41: #{tpu_custom_call.1} parent=38 // loop_header
        %s76 = sphi 0, %s80
        %p77 = scmp.ge.s32.totalorder %s76, 1
        %s81 = sphi %s63, %s63
        %s82 = sphi %s64, %s64
      $region42: #{tpu_custom_call.1} parent=38 // loop_header_branch
        %79 = sbr.rel (%p77) target = $region46
      $region43: #{tpu_custom_call.1} parent=38 // loop_body
        %v83 = vld [vmem:[%s81] sm:%s74]
        %84 = vst [vmem:[%s82] sm:%s74] %v83
      $region44: #{tpu_custom_call.1} parent=38 // loop_footer
        %s80 = sadd.s32 1, %s76
      $region45: #{tpu_custom_call.1} parent=38 // loop_footer_branch
        %75 = sbr.rel target = $region41
      $region46: #{tpu_custom_call.1} parent=38 // loop_exit
        _
    $region39: #{tpu_custom_call.1} parent=1 // pred_fallthru
      _
    // Predicated region
    $region58: #{tpu_custom_call.1} parent=1 // pred_check
      _
    $region59: #{tpu_custom_call.1} parent=1 // pred_check_branch
      %108 = sbr.rel (0) target = $region61
    $region60: #{tpu_custom_call.1} parent=1 // pred_region
      %109 = vsyncadd %s65, 16
    $region61: #{tpu_custom_call.1} parent=1 // pred_fallthru
      _
    %s110 = sadd.s32 %s14, 2
    %s111 = sld [smem:[#allocation5 + %s110]]
    %s112 = scalar_lea.vmem %s1, %s111
    %s113 = scalar_lea.vmem [#allocation2], 2
    %s114 = scalar_lea.sflag [#allocation3], 2
    %p116 = scmp.lt.u32.totalorder 1, 8
    %p117 = pneg %p116
    // Predicated region
    $region62: #{tpu_custom_call.1} parent=1 // pred_check
      _
    $region63: #{tpu_custom_call.1} parent=1 // pred_check_branch
      %119 = sbr.rel (%p116) target = $region65
    $region64: #{tpu_custom_call.1} parent=1 // pred_region
      %s134 = sand.u32 1, 7
      %p135 = scmp.eq.s32.totalorder %s134, 0
      %p136 = pneg %p135
      // Predicated region
      $region77: #{tpu_custom_call.1} parent=64 // pred_check
        _
      $region78: #{tpu_custom_call.1} parent=64 // pred_check_branch
        %138 = sbr.rel (%p135) target = $region80
      $region79: #{tpu_custom_call.1} parent=64 // pred_region
        %s139 = sand.u32 1, 7
        %s140 = ssub.s32 1, %s139
        %s141 = scalar_lea.vmem %s112, %s140
        %s142 = ssub.s32 1, %s139
        %s143 = scalar_lea.vmem %s113, %s142 [#allocation2]
        %s144 = sshllo.u32 0, %s139
        loop: start=0, step=1, limit=1
        $region81: #{tpu_custom_call.1} parent=79 // loop_pre_header
          _
        $region82: #{tpu_custom_call.1} parent=79 // loop_header
          %s146 = sphi 0, %s150
          %p147 = scmp.ge.s32.totalorder %s146, 1
          %s151 = sphi %s141, %s141
          %s152 = sphi %s143, %s143
        $region83: #{tpu_custom_call.1} parent=79 // loop_header_branch
          %149 = sbr.rel (%p147) target = $region87
        $region84: #{tpu_custom_call.1} parent=79 // loop_body
          %v153 = vld [vmem:[%s151] sm:%s144]
          %154 = vst [vmem:[%s152] sm:%s144] %v153
        $region85: #{tpu_custom_call.1} parent=79 // loop_footer
          %s150 = sadd.s32 1, %s146
        $region86: #{tpu_custom_call.1} parent=79 // loop_footer_branch
          %145 = sbr.rel target = $region82
        $region87: #{tpu_custom_call.1} parent=79 // loop_exit
          _
      $region80: #{tpu_custom_call.1} parent=64 // pred_fallthru
        _
    $region65: #{tpu_custom_call.1} parent=1 // pred_fallthru
      _
    // Predicated region
    $region66: #{tpu_custom_call.1} parent=1 // pred_check
      %p120 = pneg %p116
    $region67: #{tpu_custom_call.1} parent=1 // pred_check_branch
      %122 = sbr.rel (%p120) target = $region69
    $region68: #{tpu_custom_call.1} parent=1 // pred_region
      %s123 = sshllo.u32 0, 1
      loop: start=0, step=1, limit=1
      $region70: #{tpu_custom_call.1} parent=68 // loop_pre_header
        _
      $region71: #{tpu_custom_call.1} parent=68 // loop_header
        %s125 = sphi 0, %s129
        %p126 = scmp.ge.s32.totalorder %s125, 1
        %s130 = sphi %s112, %s112
        %s131 = sphi %s113, %s113
      $region72: #{tpu_custom_call.1} parent=68 // loop_header_branch
        %128 = sbr.rel (%p126) target = $region76
      $region73: #{tpu_custom_call.1} parent=68 // loop_body
        %v132 = vld [vmem:[%s130] sm:%s123]
        %133 = vst [vmem:[%s131] sm:%s123] %v132
      $region74: #{tpu_custom_call.1} parent=68 // loop_footer
        %s129 = sadd.s32 1, %s125
      $region75: #{tpu_custom_call.1} parent=68 // loop_footer_branch
        %124 = sbr.rel target = $region71
      $region76: #{tpu_custom_call.1} parent=68 // loop_exit
        _
    $region69: #{tpu_custom_call.1} parent=1 // pred_fallthru
      _
    // Predicated region
    $region88: #{tpu_custom_call.1} parent=1 // pred_check
      _
    $region89: #{tpu_custom_call.1} parent=1 // pred_check_branch
      %157 = sbr.rel (0) target = $region91
    $region90: #{tpu_custom_call.1} parent=1 // pred_region
      %158 = vsyncadd %s114, 16
    $region91: #{tpu_custom_call.1} parent=1 // pred_fallthru
      _
    %s159 = sadd.s32 %s14, 3
    %s160 = sld [smem:[#allocation5 + %s159]]
    %s161 = scalar_lea.vmem %s1, %s160
    %s162 = scalar_lea.vmem [#allocation2], 3
    %s163 = scalar_lea.sflag [#allocation3], 3
    %p165 = scmp.lt.u32.totalorder 1, 8
    %p166 = pneg %p165
    // Predicated region
    $region92: #{tpu_custom_call.1} parent=1 // pred_check
      _
    $region93: #{tpu_custom_call.1} parent=1 // pred_check_branch
      %168 = sbr.rel (%p165) target = $region95
    $region94: #{tpu_custom_call.1} parent=1 // pred_region
      %s183 = sand.u32 1, 7
      %p184 = scmp.eq.s32.totalorder %s183, 0
      %p185 = pneg %p184
      // Predicated region
      $region107: #{tpu_custom_call.1} parent=94 // pred_check
        _
      $region108: #{tpu_custom_call.1} parent=94 // pred_check_branch
        %187 = sbr.rel (%p184) target = $region110
      $region109: #{tpu_custom_call.1} parent=94 // pred_region
        %s188 = sand.u32 1, 7
        %s189 = ssub.s32 1, %s188
        %s190 = scalar_lea.vmem %s161, %s189
        %s191 = ssub.s32 1, %s188
        %s192 = scalar_lea.vmem %s162, %s191 [#allocation2]
        %s193 = sshllo.u32 0, %s188
        loop: start=0, step=1, limit=1
        $region111: #{tpu_custom_call.1} parent=109 // loop_pre_header
          _
        $region112: #{tpu_custom_call.1} parent=109 // loop_header
          %s195 = sphi 0, %s199
          %p196 = scmp.ge.s32.totalorder %s195, 1
          %s200 = sphi %s190, %s190
          %s201 = sphi %s192, %s192
        $region113: #{tpu_custom_call.1} parent=109 // loop_header_branch
          %198 = sbr.rel (%p196) target = $region117
        $region114: #{tpu_custom_call.1} parent=109 // loop_body
          %v202 = vld [vmem:[%s200] sm:%s193]
          %203 = vst [vmem:[%s201] sm:%s193] %v202
        $region115: #{tpu_custom_call.1} parent=109 // loop_footer
          %s199 = sadd.s32 1, %s195
        $region116: #{tpu_custom_call.1} parent=109 // loop_footer_branch
          %194 = sbr.rel target = $region112
        $region117: #{tpu_custom_call.1} parent=109 // loop_exit
          _
      $region110: #{tpu_custom_call.1} parent=94 // pred_fallthru
        _
    $region95: #{tpu_custom_call.1} parent=1 // pred_fallthru
      _
    // Predicated region
    $region96: #{tpu_custom_call.1} parent=1 // pred_check
      %p169 = pneg %p165
    $region97: #{tpu_custom_call.1} parent=1 // pred_check_branch
      %171 = sbr.rel (%p169) target = $region99
    $region98: #{tpu_custom_call.1} parent=1 // pred_region
      %s172 = sshllo.u32 0, 1
      loop: start=0, step=1, limit=1
      $region100: #{tpu_custom_call.1} parent=98 // loop_pre_header
        _
      $region101: #{tpu_custom_call.1} parent=98 // loop_header
        %s174 = sphi 0, %s178
        %p175 = scmp.ge.s32.totalorder %s174, 1
        %s179 = sphi %s161, %s161
        %s180 = sphi %s162, %s162
      $region102: #{tpu_custom_call.1} parent=98 // loop_header_branch
        %177 = sbr.rel (%p175) target = $region106
      $region103: #{tpu_custom_call.1} parent=98 // loop_body
        %v181 = vld [vmem:[%s179] sm:%s172]
        %182 = vst [vmem:[%s180] sm:%s172] %v181
      $region104: #{tpu_custom_call.1} parent=98 // loop_footer
        %s178 = sadd.s32 1, %s174
      $region105: #{tpu_custom_call.1} parent=98 // loop_footer_branch
        %173 = sbr.rel target = $region101
      $region106: #{tpu_custom_call.1} parent=98 // loop_exit
        _
    $region99: #{tpu_custom_call.1} parent=1 // pred_fallthru
      _
    // Predicated region
    $region118: #{tpu_custom_call.1} parent=1 // pred_check
      _
    $region119: #{tpu_custom_call.1} parent=1 // pred_check_branch
      %206 = sbr.rel (0) target = $region121
    $region120: #{tpu_custom_call.1} parent=1 // pred_region
      %207 = vsyncadd %s163, 16
    $region121: #{tpu_custom_call.1} parent=1 // pred_fallthru
      _
    %s208 = sadd.s32 %s14, 4
    %s209 = sld [smem:[#allocation5 + %s208]]
    %s210 = scalar_lea.vmem %s1, %s209
    %s211 = scalar_lea.vmem [#allocation2], 4
    %s212 = scalar_lea.sflag [#allocation3], 4
    %p214 = scmp.lt.u32.totalorder 1, 8
    %p215 = pneg %p214
    // Predicated region
    $region122: #{tpu_custom_call.1} parent=1 // pred_check
      _
    $region123: #{tpu_custom_call.1} parent=1 // pred_check_branch
      %217 = sbr.rel (%p214) target = $region125
    $region124: #{tpu_custom_call.1} parent=1 // pred_region
      %s232 = sand.u32 1, 7
      %p233 = scmp.eq.s32.totalorder %s232, 0
      %p234 = pneg %p233
      // Predicated region
      $region137: #{tpu_custom_call.1} parent=124 // pred_check
        _
      $region138: #{tpu_custom_call.1} parent=124 // pred_check_branch
        %236 = sbr.rel (%p233) target = $region140
      $region139: #{tpu_custom_call.1} parent=124 // pred_region
        %s237 = sand.u32 1, 7
        %s238 = ssub.s32 1, %s237
        %s239 = scalar_lea.vmem %s210, %s238
        %s240 = ssub.s32 1, %s237
        %s241 = scalar_lea.vmem %s211, %s240 [#allocation2]
        %s242 = sshllo.u32 0, %s237
        loop: start=0, step=1, limit=1
        $region141: #{tpu_custom_call.1} parent=139 // loop_pre_header
          _
        $region142: #{tpu_custom_call.1} parent=139 // loop_header
          %s244 = sphi 0, %s248
          %p245 = scmp.ge.s32.totalorder %s244, 1
          %s249 = sphi %s239, %s239
          %s250 = sphi %s241, %s241
        $region143: #{tpu_custom_call.1} parent=139 // loop_header_branch
          %247 = sbr.rel (%p245) target = $region147
        $region144: #{tpu_custom_call.1} parent=139 // loop_body
          %v251 = vld [vmem:[%s249] sm:%s242]
          %252 = vst [vmem:[%s250] sm:%s242] %v251
        $region145: #{tpu_custom_call.1} parent=139 // loop_footer
          %s248 = sadd.s32 1, %s244
        $region146: #{tpu_custom_call.1} parent=139 // loop_footer_branch
          %243 = sbr.rel target = $region142
        $region147: #{tpu_custom_call.1} parent=139 // loop_exit
          _
      $region140: #{tpu_custom_call.1} parent=124 // pred_fallthru
        _
    $region125: #{tpu_custom_call.1} parent=1 // pred_fallthru
      _
    // Predicated region
    $region126: #{tpu_custom_call.1} parent=1 // pred_check
      %p218 = pneg %p214
    $region127: #{tpu_custom_call.1} parent=1 // pred_check_branch
      %220 = sbr.rel (%p218) target = $region129
    $region128: #{tpu_custom_call.1} parent=1 // pred_region
      %s221 = sshllo.u32 0, 1
      loop: start=0, step=1, limit=1
      $region130: #{tpu_custom_call.1} parent=128 // loop_pre_header
        _
      $region131: #{tpu_custom_call.1} parent=128 // loop_header
        %s223 = sphi 0, %s227
        %p224 = scmp.ge.s32.totalorder %s223, 1
        %s228 = sphi %s210, %s210
        %s229 = sphi %s211, %s211
      $region132: #{tpu_custom_call.1} parent=128 // loop_header_branch
        %226 = sbr.rel (%p224) target = $region136
      $region133: #{tpu_custom_call.1} parent=128 // loop_body
        %v230 = vld [vmem:[%s228] sm:%s221]
        %231 = vst [vmem:[%s229] sm:%s221] %v230
      $region134: #{tpu_custom_call.1} parent=128 // loop_footer
        %s227 = sadd.s32 1, %s223
      $region135: #{tpu_custom_call.1} parent=128 // loop_footer_branch
        %222 = sbr.rel target = $region131
      $region136: #{tpu_custom_call.1} parent=128 // loop_exit
        _
    $region129: #{tpu_custom_call.1} parent=1 // pred_fallthru
      _
    // Predicated region
    $region148: #{tpu_custom_call.1} parent=1 // pred_check
      _
    $region149: #{tpu_custom_call.1} parent=1 // pred_check_branch
      %255 = sbr.rel (0) target = $region151
    $region150: #{tpu_custom_call.1} parent=1 // pred_region
      %256 = vsyncadd %s212, 16
    $region151: #{tpu_custom_call.1} parent=1 // pred_fallthru
      _
    %s257 = sadd.s32 %s14, 5
    %s258 = sld [smem:[#allocation5 + %s257]]
    %s259 = scalar_lea.vmem %s1, %s258
    %s260 = scalar_lea.vmem [#allocation2], 5
    %s261 = scalar_lea.sflag [#allocation3], 5
    %p263 = scmp.lt.u32.totalorder 1, 8
    %p264 = pneg %p263
    // Predicated region
    $region152: #{tpu_custom_call.1} parent=1 // pred_check
      _
    $region153: #{tpu_custom_call.1} parent=1 // pred_check_branch
      %266 = sbr.rel (%p263) target = $region155
    $region154: #{tpu_custom_call.1} parent=1 // pred_region
      %s281 = sand.u32 1, 7
      %p282 = scmp.eq.s32.totalorder %s281, 0
      %p283 = pneg %p282
      // Predicated region
      $region167: #{tpu_custom_call.1} parent=154 // pred_check
        _
      $region168: #{tpu_custom_call.1} parent=154 // pred_check_branch
        %285 = sbr.rel (%p282) target = $region170
      $region169: #{tpu_custom_call.1} parent=154 // pred_region
        %s286 = sand.u32 1, 7
        %s287 = ssub.s32 1, %s286
        %s288 = scalar_lea.vmem %s259, %s287
        %s289 = ssub.s32 1, %s286
        %s290 = scalar_lea.vmem %s260, %s289 [#allocation2]
        %s291 = sshllo.u32 0, %s286
        loop: start=0, step=1, limit=1
        $region171: #{tpu_custom_call.1} parent=169 // loop_pre_header
          _
        $region172: #{tpu_custom_call.1} parent=169 // loop_header
          %s293 = sphi 0, %s297
          %p294 = scmp.ge.s32.totalorder %s293, 1
          %s298 = sphi %s288, %s288
          %s299 = sphi %s290, %s290
        $region173: #{tpu_custom_call.1} parent=169 // loop_header_branch
          %296 = sbr.rel (%p294) target = $region177
        $region174: #{tpu_custom_call.1} parent=169 // loop_body
          %v300 = vld [vmem:[%s298] sm:%s291]
          %301 = vst [vmem:[%s299] sm:%s291] %v300
        $region175: #{tpu_custom_call.1} parent=169 // loop_footer
          %s297 = sadd.s32 1, %s293
        $region176: #{tpu_custom_call.1} parent=169 // loop_footer_branch
          %292 = sbr.rel target = $region172
        $region177: #{tpu_custom_call.1} parent=169 // loop_exit
          _
      $region170: #{tpu_custom_call.1} parent=154 // pred_fallthru
        _
    $region155: #{tpu_custom_call.1} parent=1 // pred_fallthru
      _
    // Predicated region
    $region156: #{tpu_custom_call.1} parent=1 // pred_check
      %p267 = pneg %p263
    $region157: #{tpu_custom_call.1} parent=1 // pred_check_branch
      %269 = sbr.rel (%p267) target = $region159
    $region158: #{tpu_custom_call.1} parent=1 // pred_region
      %s270 = sshllo.u32 0, 1
      loop: start=0, step=1, limit=1
      $region160: #{tpu_custom_call.1} parent=158 // loop_pre_header
        _
      $region161: #{tpu_custom_call.1} parent=158 // loop_header
        %s272 = sphi 0, %s276
        %p273 = scmp.ge.s32.totalorder %s272, 1
        %s277 = sphi %s259, %s259
        %s278 = sphi %s260, %s260
      $region162: #{tpu_custom_call.1} parent=158 // loop_header_branch
        %275 = sbr.rel (%p273) target = $region166
      $region163: #{tpu_custom_call.1} parent=158 // loop_body
        %v279 = vld [vmem:[%s277] sm:%s270]
        %280 = vst [vmem:[%s278] sm:%s270] %v279
      $region164: #{tpu_custom_call.1} parent=158 // loop_footer
        %s276 = sadd.s32 1, %s272
      $region165: #{tpu_custom_call.1} parent=158 // loop_footer_branch
        %271 = sbr.rel target = $region161
      $region166: #{tpu_custom_call.1} parent=158 // loop_exit
        _
    $region159: #{tpu_custom_call.1} parent=1 // pred_fallthru
      _
    // Predicated region
    $region178: #{tpu_custom_call.1} parent=1 // pred_check
      _
    $region179: #{tpu_custom_call.1} parent=1 // pred_check_branch
      %304 = sbr.rel (0) target = $region181
    $region180: #{tpu_custom_call.1} parent=1 // pred_region
      %305 = vsyncadd %s261, 16
    $region181: #{tpu_custom_call.1} parent=1 // pred_fallthru
      _
    %s306 = sadd.s32 %s14, 6
    %s307 = sld [smem:[#allocation5 + %s306]]
    %s308 = scalar_lea.vmem %s1, %s307
    %s309 = scalar_lea.vmem [#allocation2], 6
    %s310 = scalar_lea.sflag [#allocation3], 6
    %p312 = scmp.lt.u32.totalorder 1, 8
    %p313 = pneg %p312
    // Predicated region
    $region182: #{tpu_custom_call.1} parent=1 // pred_check
      _
    $region183: #{tpu_custom_call.1} parent=1 // pred_check_branch
      %315 = sbr.rel (%p312) target = $region185
    $region184: #{tpu_custom_call.1} parent=1 // pred_region
      %s330 = sand.u32 1, 7
      %p331 = scmp.eq.s32.totalorder %s330, 0
      %p332 = pneg %p331
      // Predicated region
      $region197: #{tpu_custom_call.1} parent=184 // pred_check
        _
      $region198: #{tpu_custom_call.1} parent=184 // pred_check_branch
        %334 = sbr.rel (%p331) target = $region200
      $region199: #{tpu_custom_call.1} parent=184 // pred_region
        %s335 = sand.u32 1, 7
        %s336 = ssub.s32 1, %s335
        %s337 = scalar_lea.vmem %s308, %s336
        %s338 = ssub.s32 1, %s335
        %s339 = scalar_lea.vmem %s309, %s338 [#allocation2]
        %s340 = sshllo.u32 0, %s335
        loop: start=0, step=1, limit=1
        $region201: #{tpu_custom_call.1} parent=199 // loop_pre_header
          _
        $region202: #{tpu_custom_call.1} parent=199 // loop_header
          %s342 = sphi 0, %s346
          %p343 = scmp.ge.s32.totalorder %s342, 1
          %s347 = sphi %s337, %s337
          %s348 = sphi %s339, %s339
        $region203: #{tpu_custom_call.1} parent=199 // loop_header_branch
          %345 = sbr.rel (%p343) target = $region207
        $region204: #{tpu_custom_call.1} parent=199 // loop_body
          %v349 = vld [vmem:[%s347] sm:%s340]
          %350 = vst [vmem:[%s348] sm:%s340] %v349
        $region205: #{tpu_custom_call.1} parent=199 // loop_footer
          %s346 = sadd.s32 1, %s342
        $region206: #{tpu_custom_call.1} parent=199 // loop_footer_branch
          %341 = sbr.rel target = $region202
        $region207: #{tpu_custom_call.1} parent=199 // loop_exit
          _
      $region200: #{tpu_custom_call.1} parent=184 // pred_fallthru
        _
    $region185: #{tpu_custom_call.1} parent=1 // pred_fallthru
      _
    // Predicated region
    $region186: #{tpu_custom_call.1} parent=1 // pred_check
      %p316 = pneg %p312
    $region187: #{tpu_custom_call.1} parent=1 // pred_check_branch
      %318 = sbr.rel (%p316) target = $region189
    $region188: #{tpu_custom_call.1} parent=1 // pred_region
      %s319 = sshllo.u32 0, 1
      loop: start=0, step=1, limit=1
      $region190: #{tpu_custom_call.1} parent=188 // loop_pre_header
        _
      $region191: #{tpu_custom_call.1} parent=188 // loop_header
        %s321 = sphi 0, %s325
        %p322 = scmp.ge.s32.totalorder %s321, 1
        %s326 = sphi %s308, %s308
        %s327 = sphi %s309, %s309
      $region192: #{tpu_custom_call.1} parent=188 // loop_header_branch
        %324 = sbr.rel (%p322) target = $region196
      $region193: #{tpu_custom_call.1} parent=188 // loop_body
        %v328 = vld [vmem:[%s326] sm:%s319]
        %329 = vst [vmem:[%s327] sm:%s319] %v328
      $region194: #{tpu_custom_call.1} parent=188 // loop_footer
        %s325 = sadd.s32 1, %s321
      $region195: #{tpu_custom_call.1} parent=188 // loop_footer_branch
        %320 = sbr.rel target = $region191
      $region196: #{tpu_custom_call.1} parent=188 // loop_exit
        _
    $region189: #{tpu_custom_call.1} parent=1 // pred_fallthru
      _
    // Predicated region
    $region208: #{tpu_custom_call.1} parent=1 // pred_check
      _
    $region209: #{tpu_custom_call.1} parent=1 // pred_check_branch
      %353 = sbr.rel (0) target = $region211
    $region210: #{tpu_custom_call.1} parent=1 // pred_region
      %354 = vsyncadd %s310, 16
    $region211: #{tpu_custom_call.1} parent=1 // pred_fallthru
      _
    %s355 = sadd.s32 %s14, 7
    %s356 = sld [smem:[#allocation5 + %s355]]
    %s357 = scalar_lea.vmem %s1, %s356
    %s358 = scalar_lea.vmem [#allocation2], 7
    %s359 = scalar_lea.sflag [#allocation3], 7
    %p361 = scmp.lt.u32.totalorder 1, 8
    %p362 = pneg %p361
    // Predicated region
    $region212: #{tpu_custom_call.1} parent=1 // pred_check
      _
    $region213: #{tpu_custom_call.1} parent=1 // pred_check_branch
      %364 = sbr.rel (%p361) target = $region215
    $region214: #{tpu_custom_call.1} parent=1 // pred_region
      %s379 = sand.u32 1, 7
      %p380 = scmp.eq.s32.totalorder %s379, 0
      %p381 = pneg %p380
      // Predicated region
      $region227: #{tpu_custom_call.1} parent=214 // pred_check
        _
      $region228: #{tpu_custom_call.1} parent=214 // pred_check_branch
        %383 = sbr.rel (%p380) target = $region230
      $region229: #{tpu_custom_call.1} parent=214 // pred_region
        %s384 = sand.u32 1, 7
        %s385 = ssub.s32 1, %s384
        %s386 = scalar_lea.vmem %s357, %s385
        %s387 = ssub.s32 1, %s384
        %s388 = scalar_lea.vmem %s358, %s387 [#allocation2]
        %s389 = sshllo.u32 0, %s384
        loop: start=0, step=1, limit=1
        $region231: #{tpu_custom_call.1} parent=229 // loop_pre_header
          _
        $region232: #{tpu_custom_call.1} parent=229 // loop_header
          %s391 = sphi 0, %s395
          %p392 = scmp.ge.s32.totalorder %s391, 1
          %s396 = sphi %s386, %s386
          %s397 = sphi %s388, %s388
        $region233: #{tpu_custom_call.1} parent=229 // loop_header_branch
          %394 = sbr.rel (%p392) target = $region237
        $region234: #{tpu_custom_call.1} parent=229 // loop_body
          %v398 = vld [vmem:[%s396] sm:%s389]
          %399 = vst [vmem:[%s397] sm:%s389] %v398
        $region235: #{tpu_custom_call.1} parent=229 // loop_footer
          %s395 = sadd.s32 1, %s391
        $region236: #{tpu_custom_call.1} parent=229 // loop_footer_branch
          %390 = sbr.rel target = $region232
        $region237: #{tpu_custom_call.1} parent=229 // loop_exit
          _
      $region230: #{tpu_custom_call.1} parent=214 // pred_fallthru
        _
    $region215: #{tpu_custom_call.1} parent=1 // pred_fallthru
      _
    // Predicated region
    $region216: #{tpu_custom_call.1} parent=1 // pred_check
      %p365 = pneg %p361
    $region217: #{tpu_custom_call.1} parent=1 // pred_check_branch
      %367 = sbr.rel (%p365) target = $region219
    $region218: #{tpu_custom_call.1} parent=1 // pred_region
      %s368 = sshllo.u32 0, 1
      loop: start=0, step=1, limit=1
      $region220: #{tpu_custom_call.1} parent=218 // loop_pre_header
        _
      $region221: #{tpu_custom_call.1} parent=218 // loop_header
        %s370 = sphi 0, %s374
        %p371 = scmp.ge.s32.totalorder %s370, 1
        %s375 = sphi %s357, %s357
        %s376 = sphi %s358, %s358
      $region222: #{tpu_custom_call.1} parent=218 // loop_header_branch
        %373 = sbr.rel (%p371) target = $region226
      $region223: #{tpu_custom_call.1} parent=218 // loop_body
        %v377 = vld [vmem:[%s375] sm:%s368]
        %378 = vst [vmem:[%s376] sm:%s368] %v377
      $region224: #{tpu_custom_call.1} parent=218 // loop_footer
        %s374 = sadd.s32 1, %s370
      $region225: #{tpu_custom_call.1} parent=218 // loop_footer_branch
        %369 = sbr.rel target = $region221
      $region226: #{tpu_custom_call.1} parent=218 // loop_exit
        _
    $region219: #{tpu_custom_call.1} parent=1 // pred_fallthru
      _
    // Predicated region
    $region238: #{tpu_custom_call.1} parent=1 // pred_check
      _
    $region239: #{tpu_custom_call.1} parent=1 // pred_check_branch
      %402 = sbr.rel (0) target = $region241
    $region240: #{tpu_custom_call.1} parent=1 // pred_region
      %403 = vsyncadd %s359, 16
    $region241: #{tpu_custom_call.1} parent=1 // pred_fallthru
      _
    %s404 = smul.u32 1, 1
    %s405 = sshll.u32 %s404, 4
    %406 = dma.done [#allocation3], %s405
    %s407 = sshll.u32 %s404, 4
    %408 = dma.done %s65, %s407
    %s409 = sshll.u32 %s404, 4
    %410 = dma.done %s114, %s409
    %s411 = sshll.u32 %s404, 4
    %412 = dma.done %s163, %s411
    %s413 = sshll.u32 %s404, 4
    %414 = dma.done %s212, %s413
    %s415 = sshll.u32 %s404, 4
    %416 = dma.done %s261, %s415
    %s417 = sshll.u32 %s404, 4
    %418 = dma.done %s310, %s417
    %s419 = sshll.u32 %s404, 4
    %420 = dma.done %s359, %s419
    %v421 = vld [vmem:[#allocation2] sm:$0xff]
    %vm422 = vcmask 261120
    %423 = vst.msk [vmem:[#allocation6] sm:$0xff] %vm422, %v421
    // Predicated region
    $region242: #{tpu_custom_call.1} parent=1 // pred_check
      _
    $region243: #{tpu_custom_call.1} parent=1 // pred_check_branch
      %425 = sbr.rel (0) target = $region245
    $region244: #{tpu_custom_call.1} parent=1 // pred_region
      %s427 = ssub.s32 128, 128
      %428 = vsyncadd [#allocation7], %s427
      %s430 = sshll.u32 [#allocation6], 4
      %s431 = int_to_ptr.vmem [resolvable:$true] %s430
      %433 = dma.vmem_to_hbm [thread:$0]  %s431, 128, %s2, [#allocation7]
    $region245: #{tpu_custom_call.1} parent=1 // pred_fallthru
      _
    // Predicated region
    $region246: #{tpu_custom_call.1} parent=1 // pred_check
      _
    $region247: #{tpu_custom_call.1} parent=1 // pred_check_branch
      %435 = sbr.rel (0) target = $region249
    $region248: #{tpu_custom_call.1} parent=1 // pred_region
      %436 = dma.done [#allocation7], 128
    $region249: #{tpu_custom_call.1} parent=1 // pred_fallthru
      _
    %437 = vsyncpa [#allocation7], 1
  %438 = vsyncmov [#allocation3]
  %s439 = vpop.sfrf %438
  %p440 = scmp.eq.s32.totalorder %s439, 0
  %p441 = pneg %p440
  %443 = shalt.err (%p441)
  %s444 = scalar_lea.sflag [#allocation3], 1
  %445 = vsyncmov %s444
  %s446 = vpop.sfrf %445
  %p447 = scmp.eq.s32.totalorder %s446, 0
  %p448 = pneg %p447
  %450 = shalt.err (%p448)
  %s451 = scalar_lea.sflag [#allocation3], 2
  %452 = vsyncmov %s451
  %s453 = vpop.sfrf %452
  %p454 = scmp.eq.s32.totalorder %s453, 0
  %p455 = pneg %p454
  %457 = shalt.err (%p455)
  %s458 = scalar_lea.sflag [#allocation3], 3
  %459 = vsyncmov %s458
  %s460 = vpop.sfrf %459
  %p461 = scmp.eq.s32.totalorder %s460, 0
  %p462 = pneg %p461
  %464 = shalt.err (%p462)
  %s465 = scalar_lea.sflag [#allocation3], 4
  %466 = vsyncmov %s465
  %s467 = vpop.sfrf %466
  %p468 = scmp.eq.s32.totalorder %s467, 0
  %p469 = pneg %p468
  %471 = shalt.err (%p469)
  %s472 = scalar_lea.sflag [#allocation3], 5
  %473 = vsyncmov %s472
  %s474 = vpop.sfrf %473
  %p475 = scmp.eq.s32.totalorder %s474, 0
  %p476 = pneg %p475
  %478 = shalt.err (%p476)
  %s479 = scalar_lea.sflag [#allocation3], 6
  %480 = vsyncmov %s479
  %s481 = vpop.sfrf %480
  %p482 = scmp.eq.s32.totalorder %s481, 0
  %p483 = pneg %p482
  %485 = shalt.err (%p483)
  %s486 = scalar_lea.sflag [#allocation3], 7
  %487 = vsyncmov %s486
  %s488 = vpop.sfrf %487
  %p489 = scmp.eq.s32.totalorder %s488, 0
  %p490 = pneg %p489
  %492 = shalt.err (%p490)

</llo_original>
